<compile_context>
chip_gen: v6e
topology: v6e:2x2x1
jax: 0.10.0
libtpu: 0.0.40
codegen_flags: <defaults>
</compile_context>

<pallas_src>
import math

import jax
import jax.numpy as jnp
from jax.experimental import pallas as pl
from jax.experimental.pallas import tpu as pltpu

# ----------------------------------------------------------------------------
# Model configuration (small synthetic config consistent with the module args)
# ----------------------------------------------------------------------------
VOXEL_SIZE = (0.8, 0.8, 4.0)
PC_RANGE = (0.0, -12.8, -3.0, 25.6, 12.8, 1.0)
GRID_SIZE = (32, 32, 1)            # (nx, ny, nz)
MAX_POINTS = 8                     # max points per pillar
VFE_FILTERS = 64                   # pillar_vfe num_filters = [64]
LAYER_NUMS = (1, 1, 1)             # BaseBEVBackbone layer_nums
LAYER_STRIDES = (2, 2, 2)
NUM_FILTERS = (64, 128, 256)
UPSAMPLE_STRIDES = (1, 2, 4)
NUM_UPSAMPLE_FILTERS = (128, 128, 128)
SHRINK_DIM = 256                   # shrink_header dim -> 256
COMPRESS_RATIO = 4                 # args['compression']
BN_EPS = 1e-3

ACT_DTYPE = jnp.bfloat16           # intermediate activation dtype


def _round_up(x, m):
    return ((x + m - 1) // m) * m


def _itemsize(dt):
    return jnp.dtype(dt).itemsize


# ----------------------------------------------------------------------------
# Pallas kernels
# ----------------------------------------------------------------------------
def _fused_matmul_relu_kernel(a_ref, w_ref, scale_ref, shift_ref, o_ref):
    """o = relu((a @ w) * scale + shift); bf16 MXU operands, f32 accumulation."""
    a = a_ref[...].astype(jnp.bfloat16)
    acc = jnp.dot(a, w_ref[...], preferred_element_type=jnp.float32)
    y = acc * scale_ref[...] + shift_ref[...]
    o_ref[...] = jnp.maximum(y, 0.0).astype(o_ref.dtype)


def fused_matmul_relu(a, w, scale, shift, out_dtype=ACT_DTYPE, tile_m=256):
    """Row-tiled fused matmul + affine + ReLU.  w is pre-packed (K, N) bf16."""
    M, K = a.shape
    N = w.shape[1]
    tile_m = min(tile_m, _round_up(M, 128))
    m_pad = _round_up(M, tile_m)
    a_p = a if m_pad == M else jnp.pad(a, ((0, m_pad - M), (0, 0)))
    # right-sized scoped-VMEM request (double-buffered blocks + compute temps)
    vmem = 2 * (tile_m * K * _itemsize(a.dtype) + K * N * 2
                + tile_m * N * _itemsize(out_dtype) + 2 * N * 4)
    vmem += tile_m * K * 2 + tile_m * N * 4
    vmem = int(min(100 * 2 ** 20, 2 * vmem + 8 * 2 ** 20))
    out = pl.pallas_call(
        _fused_matmul_relu_kernel,
        out_shape=jax.ShapeDtypeStruct((m_pad, N), out_dtype),
        grid=(m_pad // tile_m,),
        in_specs=[
            pl.BlockSpec((tile_m, K), lambda i: (i, 0)),
            pl.BlockSpec((K, N), lambda i: (0, 0)),
            pl.BlockSpec((1, N), lambda i: (0, 0)),
            pl.BlockSpec((1, N), lambda i: (0, 0)),
        ],
        out_specs=pl.BlockSpec((tile_m, N), lambda i: (i, 0)),
        compiler_params=pltpu.CompilerParams(
            dimension_semantics=("parallel",),
            vmem_limit_bytes=vmem),
    )(a_p, w, scale, shift)
    return out if m_pad == M else out[:M]


def _pfn_kernel(feat_ref, w_ref, scale_ref, shift_ref, o_ref):
    """PFNLayer: linear(no bias) -> folded BN -> ReLU -> max over points."""
    tv, P, Kin = feat_ref.shape
    N = w_ref.shape[1]
    x = feat_ref[...].reshape(tv * P, Kin).astype(jnp.bfloat16)
    y = jnp.dot(x, w_ref[...], preferred_element_type=jnp.float32)
    y = jnp.maximum(y * scale_ref[...] + shift_ref[...], 0.0)
    o_ref[...] = jnp.max(y.reshape(tv, P, N), axis=1).astype(o_ref.dtype)


def pfn_forward(features, w, scale, shift, tile_v=128, out_dtype=ACT_DTYPE):
    """tile_v pillars x MAX_POINTS points per grid step -> >=1024 MXU rows at scale."""
    Nv, P, Kin = features.shape
    N = w.shape[1]
    tile_v = min(tile_v, _round_up(Nv, 8))
    nv_pad = _round_up(Nv, tile_v)
    f_p = features if nv_pad == Nv else jnp.pad(
        features, ((0, nv_pad - Nv), (0, 0), (0, 0)))
    out = pl.pallas_call(
        _pfn_kernel,
        out_shape=jax.ShapeDtypeStruct((nv_pad, N), out_dtype),
        grid=(nv_pad // tile_v,),
        in_specs=[
            pl.BlockSpec((tile_v, P, Kin), lambda i: (i, 0, 0)),
            pl.BlockSpec((Kin, N), lambda i: (0, 0)),
            pl.BlockSpec((1, N), lambda i: (0, 0)),
            pl.BlockSpec((1, N), lambda i: (0, 0)),
        ],
        out_specs=pl.BlockSpec((tile_v, N), lambda i: (i, 0)),
        compiler_params=pltpu.CompilerParams(dimension_semantics=("parallel",)),
    )(f_p, w, scale, shift)
    return out if nv_pad == Nv else out[:Nv]


def _conv3x3_kernel(xp_ref, w_ref, scale_ref, shift_ref, o_ref):
    """3x3 / stride-1 conv: 9 shifted VMEM windows accumulated on the MXU in f32."""
    _, TH, W, TN = o_ref.shape
    Cin = xp_ref.shape[3]
    acc = jnp.zeros((TH * W, TN), jnp.float32)
    for di in range(3):                      # static unroll: 9 bf16 matmuls
        for dj in range(3):
            patch = xp_ref[0, di:di + TH, dj:dj + W, :]
            patch = patch.reshape(TH * W, Cin).astype(jnp.bfloat16)
            acc = acc + jnp.dot(patch, w_ref[di, dj, :, :],
                                preferred_element_type=jnp.float32)
    y = jnp.maximum(acc * scale_ref[...] + shift_ref[...], 0.0)
    o_ref[0, :, :, :] = y.reshape(TH, W, TN).astype(o_ref.dtype)


def _im2col(x, kh, kw, stride, padding):
    B, H, W, C = x.shape
    xp = jnp.pad(x, ((0, 0), (padding, padding), (padding, padding), (0, 0)))
    Ho = (H + 2 * padding - kh) // stride + 1
    Wo = (W + 2 * padding - kw) // stride + 1
    cols = []
    for di in range(kh):
        for dj in range(kw):
            cols.append(xp[:, di:di + (Ho - 1) * stride + 1:stride,
                           dj:dj + (Wo - 1) * stride + 1:stride, :])
    return jnp.concatenate(cols, axis=-1), Ho, Wo


def conv3x3_relu(x, w_taps, scale, shift, stride=1, out_dtype=ACT_DTYPE):
    """NHWC 3x3 conv -> folded BN / bias -> ReLU.  w_taps: (3,3,Cin,Cout) bf16."""
    kh, kw, Cin, Cout = w_taps.shape
    B, H, W, _ = x.shape
    if stride == 1 and kh == 3 and kw == 3 and W % 8 == 0:
        # Fused path: no HBM im2col -- each input pixel is read once; taps are
        # in-kernel shifted windows of the padded VMEM tile.
        # TODO(synk): row-tile with a haloed manual DMA (memory_space=pl.ANY)
        # for BEV maps too large to hold one padded image per grid step in VMEM.
        xp = jnp.pad(x, ((0, 0), (1, 1), (1, 1), (0, 0)))
        TN = Cout if (Cout <= 128 or Cout % 128 != 0) else 128
        n_tiles = Cout // TN
        vmem = (2 * (H + 2) * (W + 2) * Cin * _itemsize(x.dtype)
                + 2 * 9 * Cin * TN * 2
                + 2 * H * W * TN * _itemsize(out_dtype)
                + 12 * H * W * Cin * 2 + 4 * H * W * TN * 4)
        vmem = int(min(100 * 2 ** 20, 2 * vmem + 8 * 2 ** 20))
        return pl.pallas_call(
            _conv3x3_kernel,
            out_shape=jax.ShapeDtypeStruct((B, H, W, Cout), out_dtype),
            grid=(B, n_tiles),
            in_specs=[
                pl.BlockSpec((1, H + 2, W + 2, Cin), lambda b, n: (b, 0, 0, 0)),
                pl.BlockSpec((3, 3, Cin, TN), lambda b, n: (0, 0, 0, n)),
                pl.BlockSpec((1, TN), lambda b, n: (0, n)),
                pl.BlockSpec((1, TN), lambda b, n: (0, n)),
            ],
            out_specs=pl.BlockSpec((1, H, W, TN), lambda b, n: (b, 0, 0, n)),
            compiler_params=pltpu.CompilerParams(
                dimension_semantics=("parallel", "parallel"),
                vmem_limit_bytes=vmem),
        )(xp, w_taps, scale, shift)
    # Small strided / odd-width layers: im2col + bf16 fused matmul.
    patches, Ho, Wo = _im2col(x, kh, kw, stride, 1)
    w2 = w_taps.reshape(kh * kw * Cin, Cout)
    y = fused_matmul_relu(patches.reshape(B * Ho * Wo, kh * kw * Cin),
                          w2, scale, shift, out_dtype)
    return y.reshape(B, Ho, Wo, Cout)


def _deconv_ps_kernel(x_ref, w_ref, scale_ref, shift_ref, o_ref):
    """ConvTranspose2d(k=s, stride=s) for one output-row phase; the pixel shuffle
    is fused into the output block layout (1, H, 1, W, s*Cout)."""
    H = x_ref.shape[1]
    wmat = w_ref[0, :, :]
    sc = scale_ref[...]
    sh = shift_ref[...]
    for h in range(H):                       # static unroll over input rows
        xh = x_ref[0, h, :, :].astype(jnp.bfloat16)
        y = jnp.dot(xh, wmat, preferred_element_type=jnp.float32)
        y = jnp.maximum(y * sc + sh, 0.0)
        o_ref[0, h, 0, :, :] = y.astype(o_ref.dtype)


def deconv_relu(x, w_phase, scale_t, shift_t, s, out_dtype=ACT_DTYPE):
    """ConvTranspose2d(kernel=stride=s, no bias) -> folded BN -> ReLU.
    w_phase: (s, Cin, s*Cout) bf16; scale_t/shift_t: (1, s*Cout)."""
    B, H, W, Cin = x.shape
    sCout = w_phase.shape[2]
    Cout = sCout // s
    if s == 1:  # degenerate case: a 1x1 projection
        y = fused_matmul_relu(x.reshape(B * H * W, Cin), w_phase[0],
                              scale_t, shift_t, out_dtype)
        return y.reshape(B, H, W, Cout)
    out = pl.pallas_call(
        _deconv_ps_kernel,
        out_shape=jax.ShapeDtypeStruct((B, H, s, W, sCout), out_dtype),
        grid=(B, s),
        in_specs=[
            pl.BlockSpec((1, H, W, Cin), lambda b, a: (b, 0, 0, 0)),
            pl.BlockSpec((1, Cin, sCout), lambda b, a: (a, 0, 0)),
            pl.BlockSpec((1, sCout), lambda b, a: (0, 0)),
            pl.BlockSpec((1, sCout), lambda b, a: (0, 0)),
        ],
        out_specs=pl.BlockSpec((1, H, 1, W, sCout), lambda b, a: (b, 0, a, 0, 0)),
        compiler_params=pltpu.CompilerParams(
            dimension_semantics=("parallel", "parallel")),
    )(x, w_phase, scale_t, shift_t)
    # (B, H, s, W, s*Cout) and (B, H*s, W*s, Cout) share the same row-major
    # element order, so this reshape is a relabelling, not a transpose pass.
    return out.reshape(B, H * s, W * s, Cout)


# ----------------------------------------------------------------------------
# Deterministic parameter init (synthetic) + one-time weight packing
# ----------------------------------------------------------------------------
def _conv_w(key, cout, cin, kh, kw):
    return jax.random.normal(key, (cout, cin, kh, kw), jnp.float32) / math.sqrt(cin * kh * kw)


def _bn_fold(key, c, bias=None):
    k1, k2, k3, k4 = jax.random.split(key, 4)
    gamma = 1.0 + 0.1 * jax.random.normal(k1, (c,), jnp.float32)
    beta = 0.1 * jax.random.normal(k2, (c,), jnp.float32)
    mean = 0.1 * jax.random.normal(k3, (c,), jnp.float32)
    var = 0.5 + 0.5 * jnp.abs(jax.random.normal(k4, (c,), jnp.float32))
    s = gamma / jnp.sqrt(var + BN_EPS)
    b = 0.0 if bias is None else bias
    return s.reshape(1, c), ((b - mean) * s + beta).reshape(1, c)


def _pack_conv(w_pt):
    """(Cout,Cin,kh,kw) -> (kh,kw,Cin,Cout) bf16, packed once at init."""
    return jnp.transpose(w_pt, (2, 3, 1, 0)).astype(jnp.bfloat16)


def _pack_deconv(w_pt, s):
    """(Cin,Cout,s,s) -> (row_phase, Cin, col_phase*Cout) bf16."""
    cin, cout = w_pt.shape[0], w_pt.shape[1]
    return jnp.transpose(w_pt, (2, 0, 3, 1)).reshape(s, cin, s * cout).astype(jnp.bfloat16)


def init_params(key):
    keys = iter(jax.random.split(key, 96))
    params = {}

    # PillarVFE: PFNLayer = Linear(10, 64, bias=False) + BatchNorm1d(64) + ReLU + max
    w = jax.random.normal(next(keys), (10, VFE_FILTERS), jnp.float32) / math.sqrt(10)
    s, b = _bn_fold(next(keys), VFE_FILTERS)
    params['pfn'] = (w.astype(jnp.bfloat16), s, b)

    # BaseBEVBackbone blocks: [Conv3x3(stride), Conv3x3(pad1)*layer_num], each BN+ReLU
    blocks = []
    c_in = VFE_FILTERS
    for num_layers, stride, cout in zip(LAYER_NUMS, LAYER_STRIDES, NUM_FILTERS):
        layers = []
        w = _conv_w(next(keys), cout, c_in, 3, 3)
        s, b = _bn_fold(next(keys), cout)
        layers.append((_pack_conv(w), s, b, stride))
        for _ in range(num_layers):
            w = _conv_w(next(keys), cout, cout, 3, 3)
            s, b = _bn_fold(next(keys), cout)
            layers.append((_pack_conv(w), s, b, 1))
        blocks.append(layers)
        c_in = cout
    params['blocks'] = blocks

    # Deblocks: ConvTranspose2d(k=stride, stride, bias=False) + BN + ReLU
    deblocks = []
    for cin, ups, cout in zip(NUM_FILTERS, UPSAMPLE_STRIDES, NUM_UPSAMPLE_FILTERS):
        w = jax.random.normal(next(keys), (cin, cout, ups, ups), jnp.float32) / math.sqrt(cin * ups * ups)
        s, b = _bn_fold(next(keys), cout)
        deblocks.append((_pack_deconv(w, ups),
                         jnp.tile(s, (1, ups)), jnp.tile(b, (1, ups)), ups))
    params['deblocks'] = deblocks

    # shrink_conv (DownsampleConv -> DoubleConv): Conv3x3+ReLU x2 (bias, no BN)
    cin = sum(NUM_UPSAMPLE_FILTERS)
    shrink = []
    for ci, co in [(cin, SHRINK_DIM), (SHRINK_DIM, SHRINK_DIM)]:
        w = _conv_w(next(keys), co, ci, 3, 3)
        bias = 0.01 * jax.random.normal(next(keys), (co,), jnp.float32)
        shrink.append((_pack_conv(w), jnp.ones((1, co), jnp.float32), bias.reshape(1, co)))
    params['shrink'] = shrink

    # NaiveCompressor(256, ratio): (Conv3x3+BN+ReLU) x3 with 256->64->256->256
    cmid = 256 // COMPRESS_RATIO
    comp = []
    for ci, co in [(256, cmid), (cmid, 256), (256, 256)]:
        w = _conv_w(next(keys), co, ci, 3, 3)
        bias = 0.01 * jax.random.normal(next(keys), (co,), jnp.float32)
        s, b = _bn_fold(next(keys), co, bias=bias)
        comp.append((_pack_conv(w), s, b))
    params['compressor'] = comp
    return params


# ----------------------------------------------------------------------------
# Forward pass (PillarVFE -> Scatter -> BaseBEVBackbone -> shrink -> compressor)
# ----------------------------------------------------------------------------
def _pillar_vfe_augment(voxel_features, voxel_num_points, voxel_coords):
    """Build the 10-dim pillar point features (xyz,i, cluster offset, center offset) + mask."""
    vx, vy, vz = VOXEL_SIZE
    x_off = vx / 2.0 + PC_RANGE[0]
    y_off = vy / 2.0 + PC_RANGE[1]
    z_off = vz / 2.0 + PC_RANGE[2]
    npts = jnp.maximum(voxel_num_points.astype(jnp.float32), 1.0).reshape(-1, 1, 1)
    points_mean = voxel_features[:, :, :3].sum(axis=1, keepdims=True) / npts
    f_cluster = voxel_features[:, :, :3] - points_mean
    cf = voxel_coords.astype(jnp.float32)
    f_center = jnp.stack([
        voxel_features[:, :, 0] - (cf[:, 3:4] * vx + x_off),
        voxel_features[:, :, 1] - (cf[:, 2:3] * vy + y_off),
        voxel_features[:, :, 2] - (cf[:, 1:2] * vz + z_off),
    ], axis=-1)
    features = jnp.concatenate([voxel_features, f_cluster, f_center], axis=-1)  # (Nv, P, 10)
    P = features.shape[1]
    mask = (jnp.arange(P)[None, :] < voxel_num_points[:, None]).astype(jnp.float32)
    return features * mask[:, :, None]


def point_pillar_forward(params, data_dict, batch_size):
    voxel_features = data_dict['processed_lidar']['voxel_features']
    voxel_coords = data_dict['processed_lidar']['voxel_coords']
    voxel_num_points = data_dict['processed_lidar']['voxel_num_points']
    record_len = data_dict['record_len']
    pairwise_t_matrix = data_dict['pairwise_t_matrix']

    # ---- PillarVFE (Pallas) ----
    feats = _pillar_vfe_augment(voxel_features, voxel_num_points, voxel_coords)
    w, s, b = params['pfn']
    pillar_features = pfn_forward(feats, w, s, b)                 # (Nv, 64) bf16

    # ---- PointPillarScatter ----
    # TODO(synk): data-dependent scatter stays as XLA .at[].set; a scalar-prefetch
    # driven Pallas scatter (coords in SMEM -> per-pillar DMA stores, aliased canvas)
    # would avoid this HBM round trip at large pillar counts.
    nx, ny, nz = GRID_SIZE
    spatial_idx = voxel_coords[:, 1] + voxel_coords[:, 2] * nx + voxel_coords[:, 3]
    canvas = jnp.zeros((batch_size, nz * ny * nx, VFE_FILTERS), ACT_DTYPE)
    canvas = canvas.at[voxel_coords[:, 0], spatial_idx].set(pillar_features)
    x = canvas.reshape(batch_size, ny, nx, VFE_FILTERS)           # NHWC BEV canvas

    # ---- BaseBEVBackbone ----
    ups = []
    for layers, (dw, dsc, dsh, ustride) in zip(params['blocks'], params['deblocks']):
        for (cw, csc, csh, stride) in layers:
            x = conv3x3_relu(x, cw, csc, csh, stride=stride)
        ups.append(deconv_relu(x, dw, dsc, dsh, ustride))
    x = jnp.concatenate(ups, axis=-1)                             # (B, H, W, 384) bf16

    # ---- shrink_conv (DownsampleConv) ----
    for (cw, csc, csh) in params['shrink']:
        x = conv3x3_relu(x, cw, csc, csh, stride=1)

    # ---- naive_compressor ----
    comp = params['compressor']
    for idx, (cw, csc, csh) in enumerate(comp):
        out_dt = jnp.float32 if idx == len(comp) - 1 else ACT_DTYPE
        x = conv3x3_relu(x, cw, csc, csh, stride=1, out_dtype=out_dt)

    spatial_features_2d = x                                       # NHWC, f32

    middle_info = {
        'model_name': 'PointPillar',
        'features_2d': spatial_features_2d,
        'record_len': record_len,
        'pairwise_t_matrix': pairwise_t_matrix,
        'point_cloud_range': PC_RANGE,
        'spatial_correction_matrix': data_dict['spatial_correction_matrix'],
        'prior_encoding': data_dict['prior_encoding'],
    }
    return middle_info


# ----------------------------------------------------------------------------
# Example run
# ----------------------------------------------------------------------------
if __name__ == "__main__":
    key = jax.random.PRNGKey(0)
    pkey, dkey = jax.random.split(key)
    params = init_params(pkey)

    B = 2
    NV_PER = 20
    NV = B * NV_PER
    P = MAX_POINTS
    nx, ny, nz = GRID_SIZE

    k1, k2, k3, k4 = jax.random.split(dkey, 4)

    # unique (y, x) pillar coordinates per sample; coords order = (batch, z, y, x)
    coords_list = []
    for bidx in range(B):
        flat = jax.random.permutation(jax.random.fold_in(k1, bidx), ny * nx)[:NV_PER]
        yy = (flat // nx).astype(jnp.int32)
        xx = (flat % nx).astype(jnp.int32)
        bb = jnp.full((NV_PER,), bidx, jnp.int32)
        zz = jnp.zeros((NV_PER,), jnp.int32)
        coords_list.append(jnp.stack([bb, zz, yy, xx], axis=1))
    voxel_coords = jnp.concatenate(coords_list, axis=0)            # (NV, 4)

    voxel_num_points = jax.random.randint(k2, (NV,), 1, P + 1)
    pts_xyz = jax.random.uniform(k3, (NV, P, 3), jnp.float32,
                                 minval=jnp.array(PC_RANGE[:3], jnp.float32),
                                 maxval=jnp.array(PC_RANGE[3:], jnp.float32))
    intensity = jax.random.uniform(k4, (NV, P, 1), jnp.float32)
    voxel_features = jnp.concatenate([pts_xyz, intensity], axis=-1)  # (NV, P, 4)

    data_dict = {
        'processed_lidar': {
            'voxel_features': voxel_features,
            'voxel_coords': voxel_coords,
            'voxel_num_points': voxel_num_points,
        },
        'record_len': jnp.array([1, 1], jnp.int32),
        'pairwise_t_matrix': jnp.tile(jnp.eye(4, dtype=jnp.float32), (B, 2, 2, 1, 1)),
        'spatial_correction_matrix': jnp.tile(jnp.eye(4, dtype=jnp.float32), (B, 1, 1)),
        'prior_encoding': jnp.zeros((B, 3), jnp.float32),
    }

    out = point_pillar_forward(params, data_dict, batch_size=B)
    feats2d = jax.block_until_ready(out['features_2d'])
    assert feats2d.shape == (B, 16, 16, 256), feats2d.shape       # NHWC of PyTorch (B,256,16,16)
    assert feats2d.dtype == jnp.float32
    assert bool(jnp.all(jnp.isfinite(feats2d)))
    print("KERNEL_OK")
</pallas_src>

<mosaic_0001>
module attributes {stable_mosaic.version = 11 : i64} {
  func.func @_pfn_kernel(%arg0: i32, %arg1: memref<40x8x10xf32, #tpu.memory_space<vmem>>, %arg2: memref<10x64xbf16, #tpu.memory_space<vmem>>, %arg3: memref<1x64xf32, #tpu.memory_space<vmem>>, %arg4: memref<1x64xf32, #tpu.memory_space<vmem>>, %arg5: memref<40x64xbf16, #tpu.memory_space<vmem>>) attributes {dimension_semantics = [#tpu.dimension_semantics<parallel>], iteration_bounds = array<i64: 1>, scalar_prefetch = 0 : i64, scratch_operands = 0 : i64, tpu.core_type = #tpu.core_type<tc>, window_params = [{transform_indices = @transform_0, window_bounds = array<i64: 40, 8, 10>}, {pipeline_mode = #tpu.pipeline_mode<synchronous>, transform_indices = @transform_1, window_bounds = array<i64: 10, 64>}, {pipeline_mode = #tpu.pipeline_mode<synchronous>, transform_indices = @transform_2, window_bounds = array<i64: 1, 64>}, {pipeline_mode = #tpu.pipeline_mode<synchronous>, transform_indices = @transform_3, window_bounds = array<i64: 1, 64>}, {transform_indices = @transform_4, window_bounds = array<i64: 40, 64>}]} {
    %c0 = arith.constant 0 : index
    %c0_0 = arith.constant 0 : index
    %c0_1 = arith.constant 0 : index
    %0 = vector.load %arg1[%c0, %c0_0, %c0_1] : memref<40x8x10xf32, #tpu.memory_space<vmem>>, vector<40x8x10xf32>
    %1 = vector.shape_cast %0 : vector<40x8x10xf32> to vector<320x10xf32>
    %2 = arith.truncf %1 : vector<320x10xf32> to vector<320x10xbf16>
    %c0_2 = arith.constant 0 : index
    %c0_3 = arith.constant 0 : index
    %3 = vector.load %arg2[%c0_2, %c0_3] : memref<10x64xbf16, #tpu.memory_space<vmem>>, vector<10x64xbf16>
    %cst = arith.constant dense<0.000000e+00> : vector<320x64xf32>
    %4 = tpu.matmul %2, %3, %cst {dimension_numbers = #tpu.dot_dimension_numbers<[1], [0], [0], [1], [0, 0, 1, 1], [], []>} : vector<320x10xbf16>, vector<10x64xbf16>, vector<320x64xf32> -> vector<320x64xf32>
    %c0_4 = arith.constant 0 : index
    %c0_5 = arith.constant 0 : index
    %5 = vector.load %arg3[%c0_4, %c0_5] : memref<1x64xf32, #tpu.memory_space<vmem>>, vector<1x64xf32>
    %6 = vector.broadcast %5 : vector<1x64xf32> to vector<320x64xf32>
    %7 = arith.mulf %4, %6 : vector<320x64xf32>
    %c0_6 = arith.constant 0 : index
    %c0_7 = arith.constant 0 : index
    %8 = vector.load %arg4[%c0_6, %c0_7] : memref<1x64xf32, #tpu.memory_space<vmem>>, vector<1x64xf32>
    %9 = vector.broadcast %8 : vector<1x64xf32> to vector<320x64xf32>
    %10 = arith.addf %7, %9 : vector<320x64xf32>
    %cst_8 = arith.constant 0.000000e+00 : f32
    %11 = vector.broadcast %cst_8 : f32 to vector<320x64xf32>
    %12 = arith.maximumf %10, %11 : vector<320x64xf32>
    %13 = vector.shape_cast %12 : vector<320x64xf32> to vector<40x8x64xf32>
    %cst_9 = arith.constant dense<0xFF800000> : vector<40x64xf32>
    %14 = vector.multi_reduction <maximumf>, %13, %cst_9 [1] : vector<40x8x64xf32> to vector<40x64xf32>
    %15 = arith.truncf %14 : vector<40x64xf32> to vector<40x64xbf16>
    %c0_10 = arith.constant 0 : index
    %c0_11 = arith.constant 0 : index
    %16 = vector.load %arg5[%c0_10, %c0_11] : memref<40x64xbf16, #tpu.memory_space<vmem>>, vector<40x64xbf16>
    tpu.vector_store %arg5[%c0_10, %c0_11], %15 {strides = array<i32>} : memref<40x64xbf16, #tpu.memory_space<vmem>>, vector<40x64xbf16>,
    return
  }
  func.func @transform_0(%arg0: i32) -> (i32, i32, i32) {
    %c0_i32 = arith.constant 0 : i32
    %c0_i32_0 = arith.constant 0 : i32
    %c0_i32_1 = arith.constant 0 : i32
    return %arg0, %c0_i32, %c0_i32_0 : i32, i32, i32
  }
  func.func @transform_1(%arg0: i32) -> (i32, i32) {
    %c0_i32 = arith.constant 0 : i32
    %c0_i32_0 = arith.constant 0 : i32
    %c0_i32_1 = arith.constant 0 : i32
    return %c0_i32, %c0_i32_0 : i32, i32
  }
  func.func @transform_2(%arg0: i32) -> (i32, i32) {
    %c0_i32 = arith.constant 0 : i32
    %c0_i32_0 = arith.constant 0 : i32
    %c0_i32_1 = arith.constant 0 : i32
    return %c0_i32, %c0_i32_0 : i32, i32
  }
  func.func @transform_3(%arg0: i32) -> (i32, i32) {
    %c0_i32 = arith.constant 0 : i32
    %c0_i32_0 = arith.constant 0 : i32
    %c0_i32_1 = arith.constant 0 : i32
    return %c0_i32, %c0_i32_0 : i32, i32
  }
  func.func @transform_4(%arg0: i32) -> (i32, i32) {
    %c0_i32 = arith.constant 0 : i32
    %c0_i32_0 = arith.constant 0 : i32
    return %arg0, %c0_i32 : i32, i32
  }
}

</mosaic_0001>

<llo_original>
// kernel: tpu_custom_call.1
$region0: #{tpu_custom_call.1}
  #allocation0 [shape = 'u32[]', space=smem, size = 0x4, offset = 0x4, fixed_abs, tag = 'smem constant byte address 0x4 - core index']
  #allocation1 [shape = 'u32[144,128]{1,0:T(1,128)}', space=vmem, size = 0x12000, scoped, tag = 'internal scratch']
  %s0 = inlined_call_operand.vmem [shape: f32[40,8,10], index: 0, kind: input, shape index: {}]
  %s1 = inlined_call_operand.vmem [shape: bf16[10,64], index: 1, kind: input, shape index: {}]
  %s2 = inlined_call_operand.vmem [shape: f32[1,64], index: 2, kind: input, shape index: {}]
  %s3 = inlined_call_operand.vmem [shape: f32[1,64], index: 3, kind: input, shape index: {}]
  %s4 = inlined_call_operand.hbm [shape: bf16[40,64], index: 4, kind: output, shape index: {}]
  %s5 = sld [smem:[#allocation0]]
  $region26: #{tpu_custom_call.1} parent=0
    _
  %s7 = ssub.s32 1, %s5
  %s8 = scalar_select 0, %s7, %s5
  $region1: #{tpu_custom_call.1} parent=0
    #allocation2 [shape = 'u8[10240]{0}', space=vmem, size = 0x2800, scoped, tag = 'output window, operand 0, single buffered']
    #allocation3 [shape = 's32[1]{0}', space=sflag, size = 0x4, scoped, tag = 'scoped memory for tpu_custom_call.1']
    %9 = vsyncpa [#allocation3], 0
    // Predicated region
    $region2: #{tpu_custom_call.1} parent=1 // pred_check
      _
    $region3: #{tpu_custom_call.1} parent=1 // pred_check_branch
      %11 = sbr.rel (0) target = $region5
    $region4: #{tpu_custom_call.1} parent=1 // pred_region
      _
    $region5: #{tpu_custom_call.1} parent=1 // pred_fallthru
      _
    // Predicated region
    $region6: #{tpu_custom_call.1} parent=1 // pred_check
      _
    $region7: #{tpu_custom_call.1} parent=1 // pred_check_branch
      %13 = sbr.rel (0) target = $region9
    $region8: #{tpu_custom_call.1} parent=1 // pred_region
      _
    $region9: #{tpu_custom_call.1} parent=1 // pred_fallthru
      _
    // Predicated region
    $region10: #{tpu_custom_call.1} parent=1 // pred_check
      _
    $region11: #{tpu_custom_call.1} parent=1 // pred_check_branch
      %15 = sbr.rel (0) target = $region13
    $region12: #{tpu_custom_call.1} parent=1 // pred_region
      _
    $region13: #{tpu_custom_call.1} parent=1 // pred_fallthru
      _
    // Predicated region
    $region14: #{tpu_custom_call.1} parent=1 // pred_check
      _
    $region15: #{tpu_custom_call.1} parent=1 // pred_check_branch
      %17 = sbr.rel (0) target = $region17
    $region16: #{tpu_custom_call.1} parent=1 // pred_region
      _
    $region17: #{tpu_custom_call.1} parent=1 // pred_fallthru
      _
    %v19 = vld [vmem:[%s0] sm:$0xff]
    %v20 = vld [vmem:[%s0 + $0x8] sm:$0xff]
    %v21 = vld [vmem:[%s0 + $0x10] sm:$0xff]
    %v22 = vld [vmem:[%s0 + $0x18] sm:$0xff]
    %v23 = vld [vmem:[%s0 + $0x20] sm:$0xff]
    %v24 = vld [vmem:[%s0 + $0x28] sm:$0xff]
    %v25 = vld [vmem:[%s0 + $0x30] sm:$0xff]
    %v26 = vld [vmem:[%s0 + $0x38] sm:$0xff]
    %v27 = vld [vmem:[%s0 + $0x40] sm:$0xff]
    %v28 = vld [vmem:[%s0 + $0x48] sm:$0xff]
    %v29 = vld [vmem:[%s0 + $0x50] sm:$0xff]
    %v30 = vld [vmem:[%s0 + $0x58] sm:$0xff]
    %v31 = vld [vmem:[%s0 + $0x60] sm:$0xff]
    %v32 = vld [vmem:[%s0 + $0x68] sm:$0xff]
    %v33 = vld [vmem:[%s0 + $0x70] sm:$0xff]
    %v34 = vld [vmem:[%s0 + $0x78] sm:$0xff]
    %v35 = vld [vmem:[%s0 + $0x80] sm:$0xff]
    %v36 = vld [vmem:[%s0 + $0x88] sm:$0xff]
    %v37 = vld [vmem:[%s0 + $0x90] sm:$0xff]
    %v38 = vld [vmem:[%s0 + $0x98] sm:$0xff]
    %v39 = vld [vmem:[%s0 + $0xa0] sm:$0xff]
    %v40 = vld [vmem:[%s0 + $0xa8] sm:$0xff]
    %v41 = vld [vmem:[%s0 + $0xb0] sm:$0xff]
    %v42 = vld [vmem:[%s0 + $0xb8] sm:$0xff]
    %v43 = vld [vmem:[%s0 + $0xc0] sm:$0xff]
    %v44 = vld [vmem:[%s0 + $0xc8] sm:$0xff]
    %v45 = vld [vmem:[%s0 + $0xd0] sm:$0xff]
    %v46 = vld [vmem:[%s0 + $0xd8] sm:$0xff]
    %v47 = vld [vmem:[%s0 + $0xe0] sm:$0xff]
    %v48 = vld [vmem:[%s0 + $0xe8] sm:$0xff]
    %v49 = vld [vmem:[%s0 + $0xf0] sm:$0xff]
    %v50 = vld [vmem:[%s0 + $0xf8] sm:$0xff]
    %v51 = vld [vmem:[%s0 + $0x100] sm:$0xff]
    %v52 = vld [vmem:[%s0 + $0x108] sm:$0xff]
    %v53 = vld [vmem:[%s0 + $0x110] sm:$0xff]
    %v54 = vld [vmem:[%s0 + $0x118] sm:$0xff]
    %v55 = vld [vmem:[%s0 + $0x120] sm:$0xff]
    %v56 = vld [vmem:[%s0 + $0x128] sm:$0xff]
    %v57 = vld [vmem:[%s0 + $0x130] sm:$0xff]
    %v58 = vld [vmem:[%s0 + $0x138] sm:$0xff]
    %v59 = vpack.c.bf16 %v20, %v19
    %v60 = vpack.c.bf16 %v22, %v21
    %v61 = vpack.c.bf16 %v24, %v23
    %v62 = vpack.c.bf16 %v26, %v25
    %v63 = vpack.c.bf16 %v28, %v27
    %v64 = vpack.c.bf16 %v30, %v29
    %v65 = vpack.c.bf16 %v32, %v31
    %v66 = vpack.c.bf16 %v34, %v33
    %v67 = vpack.c.bf16 %v36, %v35
    %v68 = vpack.c.bf16 %v38, %v37
    %v69 = vpack.c.bf16 %v40, %v39
    %v70 = vpack.c.bf16 %v42, %v41
    %v71 = vpack.c.bf16 %v44, %v43
    %v72 = vpack.c.bf16 %v46, %v45
    %v73 = vpack.c.bf16 %v48, %v47
    %v74 = vpack.c.bf16 %v50, %v49
    %v75 = vpack.c.bf16 %v52, %v51
    %v76 = vpack.c.bf16 %v54, %v53
    %v77 = vpack.c.bf16 %v56, %v55
    %v78 = vpack.c.bf16 %v58, %v57
    %v79 = vld [vmem:[%s1] sm:$0xf]
    %v80 = vld [vmem:[%s1 + $0x4] sm:$0x1]
    %v83 = vunpack.c.l.b16 %v79
    %v84 = vunpack.c.l.b16 %v80
    %v85 = vpack.c.b16 %v84, %v83
    %vm86 = vcmask 80896
    %v88 = vsel %vm86, %v59, 0
    %v91 = vsel %vm86, %v60, 0
    %v94 = vsel %vm86, %v61, 0
    %v97 = vsel %vm86, %v62, 0
    %v100 = vsel %vm86, %v63, 0
    %v103 = vsel %vm86, %v64, 0
    %v106 = vsel %vm86, %v65, 0
    %v109 = vsel %vm86, %v66, 0
    %v112 = vsel %vm86, %v67, 0
    %v115 = vsel %vm86, %v68, 0
    %v118 = vsel %vm86, %v69, 0
    %v121 = vsel %vm86, %v70, 0
    %v124 = vsel %vm86, %v71, 0
    %v127 = vsel %vm86, %v72, 0
    %v130 = vsel %vm86, %v73, 0
    %v133 = vsel %vm86, %v74, 0
    %v136 = vsel %vm86, %v75, 0
    %v139 = vsel %vm86, %v76, 0
    %v142 = vsel %vm86, %v77, 0
    %v145 = vsel %vm86, %v78, 0
    %vm147 = vcmask 1044480
    %v149 = vsel %vm147, %v85, 0
    %151 = vmatprep.subr.bf16.mxu0 0
    %152 = vmatpush1.bf16.msra.mxu0 0
    %153 = vmatprep.subr.bf16.mxu0 0
    %154 = vmatpush1.bf16.msra.mxu0 0
    %155 = vmatprep.subr.bf16.mxu0 0
    %156 = vmatpush1.bf16.msra.mxu0 0
    %157 = vmatprep.subr.bf16.mxu0 0
    %158 = vmatpush1.bf16.msra.mxu0 0
    %159 = vmatprep.subr.bf16.mxu0 0
    %160 = vmatpush1.bf16.msra.mxu0 0
    %161 = vmatprep.subr.bf16.mxu0 0
    %162 = vmatpush1.bf16.msra.mxu0 0
    %163 = vmatprep.subr.bf16.mxu0 0
    %164 = vmatpush1.bf16.msra.mxu0 0
    %165 = vmatprep.subr.bf16.mxu0 0
    %166 = vmatpush1.bf16.msra.mxu0 %v149
    %167 = vmatprep.subr.bf16.mxu0 0
    %168 = vmatpush2.bf16.msra.mxu0 0
    %169 = vmatprep.subr.bf16.mxu0 0
    %170 = vmatpush2.bf16.msra.mxu0 0
    %171 = vmatprep.subr.bf16.mxu0 0
    %172 = vmatpush2.bf16.msra.mxu0 0
    %173 = vmatprep.subr.bf16.mxu0 0
    %174 = vmatpush2.bf16.msra.mxu0 0
    %175 = vmatprep.subr.bf16.mxu0 0
    %176 = vmatpush2.bf16.msra.mxu0 0
    %177 = vmatprep.subr.bf16.mxu0 0
    %178 = vmatpush2.bf16.msra.mxu0 0
    %179 = vmatprep.subr.bf16.mxu0 0
    %180 = vmatpush2.bf16.msra.mxu0 0
    %181 = vmatprep.subr.bf16.mxu0 0
    %182 = vmatpush2.bf16.msra.mxu0 0
    %183 = vmatprep.mubr.bf16.mxu0 0
    %184 = vmatmul.mubr.bf16.gmra.mxu0 %v88
    %v185 = vpop.f32.mrf.mxu0
    %v186 = vadd.f32 0.0, %v185
    %v187 = vpop.f32.mrf.mxu0
    %v188 = vpop.f32.mrf.mxu0
    %v189 = vadd.f32 0.0, %v188
    %v190 = vpop.f32.mrf.mxu0
    %191 = vmatprep.mubr.bf16.mxu0 0
    %192 = vmatmul.mubr.bf16.gmra.mxu0 %v91
    %v193 = vpop.f32.mrf.mxu0
    %v194 = vadd.f32 0.0, %v193
    %v195 = vpop.f32.mrf.mxu0
    %v196 = vpop.f32.mrf.mxu0
    %v197 = vadd.f32 0.0, %v196
    %v198 = vpop.f32.mrf.mxu0
    %199 = vmatprep.mubr.bf16.mxu0 0
    %200 = vmatmul.mubr.bf16.gmra.mxu0 %v94
    %v201 = vpop.f32.mrf.mxu0
    %v202 = vadd.f32 0.0, %v201
    %v203 = vpop.f32.mrf.mxu0
    %v204 = vpop.f32.mrf.mxu0
    %v205 = vadd.f32 0.0, %v204
    %v206 = vpop.f32.mrf.mxu0
    %207 = vmatprep.mubr.bf16.mxu0 0
    %208 = vmatmul.mubr.bf16.gmra.mxu0 %v97
    %v209 = vpop.f32.mrf.mxu0
    %v210 = vadd.f32 0.0, %v209
    %v211 = vpop.f32.mrf.mxu0
    %v212 = vpop.f32.mrf.mxu0
    %v213 = vadd.f32 0.0, %v212
    %v214 = vpop.f32.mrf.mxu0
    %215 = vmatprep.mubr.bf16.mxu0 0
    %216 = vmatmul.mubr.bf16.gmra.mxu0 %v100
    %v217 = vpop.f32.mrf.mxu0
    %v218 = vadd.f32 0.0, %v217
    %v219 = vpop.f32.mrf.mxu0
    %v220 = vpop.f32.mrf.mxu0
    %v221 = vadd.f32 0.0, %v220
    %v222 = vpop.f32.mrf.mxu0
    %223 = vmatprep.mubr.bf16.mxu0 0
    %224 = vmatmul.mubr.bf16.gmra.mxu0 %v103
    %v225 = vpop.f32.mrf.mxu0
    %v226 = vadd.f32 0.0, %v225
    %v227 = vpop.f32.mrf.mxu0
    %v228 = vpop.f32.mrf.mxu0
    %v229 = vadd.f32 0.0, %v228
    %v230 = vpop.f32.mrf.mxu0
    %231 = vmatprep.mubr.bf16.mxu0 0
    %232 = vmatmul.mubr.bf16.gmra.mxu0 %v106
    %v233 = vpop.f32.mrf.mxu0
    %v234 = vadd.f32 0.0, %v233
    %v235 = vpop.f32.mrf.mxu0
    %v236 = vpop.f32.mrf.mxu0
    %v237 = vadd.f32 0.0, %v236
    %v238 = vpop.f32.mrf.mxu0
    %239 = vmatprep.mubr.bf16.mxu0 0
    %240 = vmatmul.mubr.bf16.gmra.mxu0 %v109
    %v241 = vpop.f32.mrf.mxu0
    %v242 = vadd.f32 0.0, %v241
    %v243 = vpop.f32.mrf.mxu0
    %v244 = vpop.f32.mrf.mxu0
    %v245 = vadd.f32 0.0, %v244
    %v246 = vpop.f32.mrf.mxu0
    %247 = vmatprep.mubr.bf16.mxu0 0
    %248 = vmatmul.mubr.bf16.gmra.mxu0 %v112
    %v249 = vpop.f32.mrf.mxu0
    %v250 = vadd.f32 0.0, %v249
    %v251 = vpop.f32.mrf.mxu0
    %v252 = vpop.f32.mrf.mxu0
    %v253 = vadd.f32 0.0, %v252
    %v254 = vpop.f32.mrf.mxu0
    %255 = vmatprep.mubr.bf16.mxu0 0
    %256 = vmatmul.mubr.bf16.gmra.mxu0 %v115
    %v257 = vpop.f32.mrf.mxu0
    %v258 = vadd.f32 0.0, %v257
    %v259 = vpop.f32.mrf.mxu0
    %v260 = vpop.f32.mrf.mxu0
    %v261 = vadd.f32 0.0, %v260
    %v262 = vpop.f32.mrf.mxu0
    %263 = vmatprep.mubr.bf16.mxu0 0
    %264 = vmatmul.mubr.bf16.gmra.mxu0 %v118
    %v265 = vpop.f32.mrf.mxu0
    %v266 = vadd.f32 0.0, %v265
    %v267 = vpop.f32.mrf.mxu0
    %v268 = vpop.f32.mrf.mxu0
    %v269 = vadd.f32 0.0, %v268
    %v270 = vpop.f32.mrf.mxu0
    %271 = vmatprep.mubr.bf16.mxu0 0
    %272 = vmatmul.mubr.bf16.gmra.mxu0 %v121
    %v273 = vpop.f32.mrf.mxu0
    %v274 = vadd.f32 0.0, %v273
    %v275 = vpop.f32.mrf.mxu0
    %v276 = vpop.f32.mrf.mxu0
    %v277 = vadd.f32 0.0, %v276
    %v278 = vpop.f32.mrf.mxu0
    %279 = vmatprep.mubr.bf16.mxu0 0
    %280 = vmatmul.mubr.bf16.gmra.mxu0 %v124
    %v281 = vpop.f32.mrf.mxu0
    %v282 = vadd.f32 0.0, %v281
    %v283 = vpop.f32.mrf.mxu0
    %v284 = vpop.f32.mrf.mxu0
    %v285 = vadd.f32 0.0, %v284
    %v286 = vpop.f32.mrf.mxu0
    %287 = vmatprep.mubr.bf16.mxu0 0
    %288 = vmatmul.mubr.bf16.gmra.mxu0 %v127
    %v289 = vpop.f32.mrf.mxu0
    %v290 = vadd.f32 0.0, %v289
    %v291 = vpop.f32.mrf.mxu0
    %v292 = vpop.f32.mrf.mxu0
    %v293 = vadd.f32 0.0, %v292
    %v294 = vpop.f32.mrf.mxu0
    %295 = vmatprep.mubr.bf16.mxu0 0
    %296 = vmatmul.mubr.bf16.gmra.mxu0 %v130
    %v297 = vpop.f32.mrf.mxu0
    %v298 = vadd.f32 0.0, %v297
    %v299 = vpop.f32.mrf.mxu0
    %v300 = vpop.f32.mrf.mxu0
    %v301 = vadd.f32 0.0, %v300
    %v302 = vpop.f32.mrf.mxu0
    %303 = vmatprep.mubr.bf16.mxu0 0
    %304 = vmatmul.mubr.bf16.gmra.mxu0 %v133
    %v305 = vpop.f32.mrf.mxu0
    %v306 = vadd.f32 0.0, %v305
    %v307 = vpop.f32.mrf.mxu0
    %v308 = vpop.f32.mrf.mxu0
    %v309 = vadd.f32 0.0, %v308
    %v310 = vpop.f32.mrf.mxu0
    %311 = vmatprep.mubr.bf16.mxu0 0
    %312 = vmatmul.mubr.bf16.gmra.mxu0 %v136
    %v313 = vpop.f32.mrf.mxu0
    %v314 = vadd.f32 0.0, %v313
    %v315 = vpop.f32.mrf.mxu0
    %v316 = vpop.f32.mrf.mxu0
    %v317 = vadd.f32 0.0, %v316
    %v318 = vpop.f32.mrf.mxu0
    %319 = vmatprep.mubr.bf16.mxu0 0
    %320 = vmatmul.mubr.bf16.gmra.mxu0 %v139
    %v321 = vpop.f32.mrf.mxu0
    %v322 = vadd.f32 0.0, %v321
    %v323 = vpop.f32.mrf.mxu0
    %v324 = vpop.f32.mrf.mxu0
    %v325 = vadd.f32 0.0, %v324
    %v326 = vpop.f32.mrf.mxu0
    %327 = vmatprep.mubr.bf16.mxu0 0
    %328 = vmatmul.mubr.bf16.gmra.mxu0 %v142
    %v329 = vpop.f32.mrf.mxu0
    %v330 = vadd.f32 0.0, %v329
    %v331 = vpop.f32.mrf.mxu0
    %v332 = vpop.f32.mrf.mxu0
    %v333 = vadd.f32 0.0, %v332
    %v334 = vpop.f32.mrf.mxu0
    %335 = vmatprep.mubr.bf16.mxu0 0
    %336 = vmatmul.mubr.bf16.gmra.mxu0 %v145
    %v337 = vpop.f32.mrf.mxu0
    %v338 = vadd.f32 0.0, %v337
    %v339 = vpop.f32.mrf.mxu0
    %v340 = vpop.f32.mrf.mxu0
    %v341 = vadd.f32 0.0, %v340
    %v342 = vpop.f32.mrf.mxu0
    %343 = vdwg.mxu0
    %v344 = vld [vmem:[%s2] sm:$0x1]
    %v346 = vlaneseq
    %v347 = vshrl.u32 %v346, 7
    %v348 = vsub.s32 0, %v347
    %v349 = vrot.slane %v344, %v348
    %v351 = vmul.f32 %v186, %v349
    %v352 = vmul.f32 %v189, %v349
    %v353 = vmul.f32 %v194, %v349
    %v354 = vmul.f32 %v197, %v349
    %v355 = vmul.f32 %v202, %v349
    %v356 = vmul.f32 %v205, %v349
    %v357 = vmul.f32 %v210, %v349
    %v358 = vmul.f32 %v213, %v349
    %v359 = vmul.f32 %v218, %v349
    %v360 = vmul.f32 %v221, %v349
    %v361 = vmul.f32 %v226, %v349
    %v362 = vmul.f32 %v229, %v349
    %v363 = vmul.f32 %v234, %v349
    %v364 = vmul.f32 %v237, %v349
    %v365 = vmul.f32 %v242, %v349
    %v366 = vmul.f32 %v245, %v349
    %v367 = vmul.f32 %v250, %v349
    %v368 = vmul.f32 %v253, %v349
    %v369 = vmul.f32 %v258, %v349
    %v370 = vmul.f32 %v261, %v349
    %v371 = vmul.f32 %v266, %v349
    %v372 = vmul.f32 %v269, %v349
    %v373 = vmul.f32 %v274, %v349
    %v374 = vmul.f32 %v277, %v349
    %v375 = vmul.f32 %v282, %v349
    %v376 = vmul.f32 %v285, %v349
    %v377 = vmul.f32 %v290, %v349
    %v378 = vmul.f32 %v293, %v349
    %v379 = vmul.f32 %v298, %v349
    %v380 = vmul.f32 %v301, %v349
    %v381 = vmul.f32 %v306, %v349
    %v382 = vmul.f32 %v309, %v349
    %v383 = vmul.f32 %v314, %v349
    %v384 = vmul.f32 %v317, %v349
    %v385 = vmul.f32 %v322, %v349
    %v386 = vmul.f32 %v325, %v349
    %v387 = vmul.f32 %v330, %v349
    %v388 = vmul.f32 %v333, %v349
    %v389 = vmul.f32 %v338, %v349
    %v390 = vmul.f32 %v341, %v349
    %v391 = vld [vmem:[%s3] sm:$0x1]
    %v393 = vlaneseq
    %v394 = vshrl.u32 %v393, 7
    %v395 = vsub.s32 0, %v394
    %v396 = vrot.slane %v391, %v395
    %v398 = vadd.f32 %v351, %v396
    %v399 = vadd.f32 %v352, %v396
    %v400 = vadd.f32 %v353, %v396
    %v401 = vadd.f32 %v354, %v396
    %v402 = vadd.f32 %v355, %v396
    %v403 = vadd.f32 %v356, %v396
    %v404 = vadd.f32 %v357, %v396
    %v405 = vadd.f32 %v358, %v396
    %v406 = vadd.f32 %v359, %v396
    %v407 = vadd.f32 %v360, %v396
    %v408 = vadd.f32 %v361, %v396
    %v409 = vadd.f32 %v362, %v396
    %v410 = vadd.f32 %v363, %v396
    %v411 = vadd.f32 %v364, %v396
    %v412 = vadd.f32 %v365, %v396
    %v413 = vadd.f32 %v366, %v396
    %v414 = vadd.f32 %v367, %v396
    %v415 = vadd.f32 %v368, %v396
    %v416 = vadd.f32 %v369, %v396
    %v417 = vadd.f32 %v370, %v396
    %v418 = vadd.f32 %v371, %v396
    %v419 = vadd.f32 %v372, %v396
    %v420 = vadd.f32 %v373, %v396
    %v421 = vadd.f32 %v374, %v396
    %v422 = vadd.f32 %v375, %v396
    %v423 = vadd.f32 %v376, %v396
    %v424 = vadd.f32 %v377, %v396
    %v425 = vadd.f32 %v378, %v396
    %v426 = vadd.f32 %v379, %v396
    %v427 = vadd.f32 %v380, %v396
    %v428 = vadd.f32 %v381, %v396
    %v429 = vadd.f32 %v382, %v396
    %v430 = vadd.f32 %v383, %v396
    %v431 = vadd.f32 %v384, %v396
    %v432 = vadd.f32 %v385, %v396
    %v433 = vadd.f32 %v386, %v396
    %v434 = vadd.f32 %v387, %v396
    %v435 = vadd.f32 %v388, %v396
    %v436 = vadd.f32 %v389, %v396
    %v437 = vadd.f32 %v390, %v396
    %v438 = vmax.f32 %v398, 0.0
    %v439 = vmax.f32 %v399, 0.0
    %v440 = vmax.f32 %v400, 0.0
    %v441 = vmax.f32 %v401, 0.0
    %v442 = vmax.f32 %v402, 0.0
    %v443 = vmax.f32 %v403, 0.0
    %v444 = vmax.f32 %v404, 0.0
    %v445 = vmax.f32 %v405, 0.0
    %v446 = vmax.f32 %v406, 0.0
    %v447 = vmax.f32 %v407, 0.0
    %v448 = vmax.f32 %v408, 0.0
    %v449 = vmax.f32 %v409, 0.0
    %v450 = vmax.f32 %v410, 0.0
    %v451 = vmax.f32 %v411, 0.0
    %v452 = vmax.f32 %v412, 0.0
    %v453 = vmax.f32 %v413, 0.0
    %v454 = vmax.f32 %v414, 0.0
    %v455 = vmax.f32 %v415, 0.0
    %v456 = vmax.f32 %v416, 0.0
    %v457 = vmax.f32 %v417, 0.0
    %v458 = vmax.f32 %v418, 0.0
    %v459 = vmax.f32 %v419, 0.0
    %v460 = vmax.f32 %v420, 0.0
    %v461 = vmax.f32 %v421, 0.0
    %v462 = vmax.f32 %v422, 0.0
    %v463 = vmax.f32 %v423, 0.0
    %v464 = vmax.f32 %v424, 0.0
    %v465 = vmax.f32 %v425, 0.0
    %v466 = vmax.f32 %v426, 0.0
    %v467 = vmax.f32 %v427, 0.0
    %v468 = vmax.f32 %v428, 0.0
    %v469 = vmax.f32 %v429, 0.0
    %v470 = vmax.f32 %v430, 0.0
    %v471 = vmax.f32 %v431, 0.0
    %v472 = vmax.f32 %v432, 0.0
    %v473 = vmax.f32 %v433, 0.0
    %v474 = vmax.f32 %v434, 0.0
    %v475 = vmax.f32 %v435, 0.0
    %v476 = vmax.f32 %v436, 0.0
    %v477 = vmax.f32 %v437, 0.0
    %vm478 = vcmask 523264
    %v479 = vsel %vm478, %v438, -inf
    %v480 = vrot.slane %v479, 4
    %v481 = vmax.f32 %v479, %v480
    %v482 = vrot.slane %v481, 2
    %v483 = vmax.f32 %v481, %v482
    %v484 = vrot.slane %v483, 1
    %v485 = vmax.f32 %v483, %v484
    %v486 = vsel %vm478, %v439, -inf
    %v487 = vrot.slane %v486, 4
    %v488 = vmax.f32 %v486, %v487
    %v489 = vrot.slane %v488, 2
    %v490 = vmax.f32 %v488, %v489
    %v491 = vrot.slane %v490, 1
    %v492 = vmax.f32 %v490, %v491
    %v493 = vsel %vm478, %v440, -inf
    %v494 = vrot.slane %v493, 4
    %v495 = vmax.f32 %v493, %v494
    %v496 = vrot.slane %v495, 2
    %v497 = vmax.f32 %v495, %v496
    %v498 = vrot.slane %v497, 1
    %v499 = vmax.f32 %v497, %v498
    %v500 = vsel %vm478, %v441, -inf
    %v501 = vrot.slane %v500, 4
    %v502 = vmax.f32 %v500, %v501
    %v503 = vrot.slane %v502, 2
    %v504 = vmax.f32 %v502, %v503
    %v505 = vrot.slane %v504, 1
    %v506 = vmax.f32 %v504, %v505
    %v507 = vsel %vm478, %v442, -inf
    %v508 = vrot.slane %v507, 4
    %v509 = vmax.f32 %v507, %v508
    %v510 = vrot.slane %v509, 2
    %v511 = vmax.f32 %v509, %v510
    %v512 = vrot.slane %v511, 1
    %v513 = vmax.f32 %v511, %v512
    %v514 = vsel %vm478, %v443, -inf
    %v515 = vrot.slane %v514, 4
    %v516 = vmax.f32 %v514, %v515
    %v517 = vrot.slane %v516, 2
    %v518 = vmax.f32 %v516, %v517
    %v519 = vrot.slane %v518, 1
    %v520 = vmax.f32 %v518, %v519
    %v521 = vsel %vm478, %v444, -inf
    %v522 = vrot.slane %v521, 4
    %v523 = vmax.f32 %v521, %v522
    %v524 = vrot.slane %v523, 2
    %v525 = vmax.f32 %v523, %v524
    %v526 = vrot.slane %v525, 1
    %v527 = vmax.f32 %v525, %v526
    %v528 = vsel %vm478, %v445, -inf
    %v529 = vrot.slane %v528, 4
    %v530 = vmax.f32 %v528, %v529
    %v531 = vrot.slane %v530, 2
    %v532 = vmax.f32 %v530, %v531
    %v533 = vrot.slane %v532, 1
    %v534 = vmax.f32 %v532, %v533
    %v535 = vsel %vm478, %v446, -inf
    %v536 = vrot.slane %v535, 4
    %v537 = vmax.f32 %v535, %v536
    %v538 = vrot.slane %v537, 2
    %v539 = vmax.f32 %v537, %v538
    %v540 = vrot.slane %v539, 1
    %v541 = vmax.f32 %v539, %v540
    %v542 = vsel %vm478, %v447, -inf
    %v543 = vrot.slane %v542, 4
    %v544 = vmax.f32 %v542, %v543
    %v545 = vrot.slane %v544, 2
    %v546 = vmax.f32 %v544, %v545
    %v547 = vrot.slane %v546, 1
    %v548 = vmax.f32 %v546, %v547
    %v549 = vsel %vm478, %v448, -inf
    %v550 = vrot.slane %v549, 4
    %v551 = vmax.f32 %v549, %v550
    %v552 = vrot.slane %v551, 2
    %v553 = vmax.f32 %v551, %v552
    %v554 = vrot.slane %v553, 1
    %v555 = vmax.f32 %v553, %v554
    %v556 = vsel %vm478, %v449, -inf
    %v557 = vrot.slane %v556, 4
    %v558 = vmax.f32 %v556, %v557
    %v559 = vrot.slane %v558, 2
    %v560 = vmax.f32 %v558, %v559
    %v561 = vrot.slane %v560, 1
    %v562 = vmax.f32 %v560, %v561
    %v563 = vsel %vm478, %v450, -inf
    %v564 = vrot.slane %v563, 4
    %v565 = vmax.f32 %v563, %v564
    %v566 = vrot.slane %v565, 2
    %v567 = vmax.f32 %v565, %v566
    %v568 = vrot.slane %v567, 1
    %v569 = vmax.f32 %v567, %v568
    %v570 = vsel %vm478, %v451, -inf
    %v571 = vrot.slane %v570, 4
    %v572 = vmax.f32 %v570, %v571
    %v573 = vrot.slane %v572, 2
    %v574 = vmax.f32 %v572, %v573
    %v575 = vrot.slane %v574, 1
    %v576 = vmax.f32 %v574, %v575
    %v577 = vsel %vm478, %v452, -inf
    %v578 = vrot.slane %v577, 4
    %v579 = vmax.f32 %v577, %v578
    %v580 = vrot.slane %v579, 2
    %v581 = vmax.f32 %v579, %v580
    %v582 = vrot.slane %v581, 1
    %v583 = vmax.f32 %v581, %v582
    %v584 = vsel %vm478, %v453, -inf
    %v585 = vrot.slane %v584, 4
    %v586 = vmax.f32 %v584, %v585
    %v587 = vrot.slane %v586, 2
    %v588 = vmax.f32 %v586, %v587
    %v589 = vrot.slane %v588, 1
    %v590 = vmax.f32 %v588, %v589
    %v591 = vsel %vm478, %v454, -inf
    %v592 = vrot.slane %v591, 4
    %v593 = vmax.f32 %v591, %v592
    %v594 = vrot.slane %v593, 2
    %v595 = vmax.f32 %v593, %v594
    %v596 = vrot.slane %v595, 1
    %v597 = vmax.f32 %v595, %v596
    %v598 = vsel %vm478, %v455, -inf
    %v599 = vrot.slane %v598, 4
    %v600 = vmax.f32 %v598, %v599
    %v601 = vrot.slane %v600, 2
    %v602 = vmax.f32 %v600, %v601
    %v603 = vrot.slane %v602, 1
    %v604 = vmax.f32 %v602, %v603
    %v605 = vsel %vm478, %v456, -inf
    %v606 = vrot.slane %v605, 4
    %v607 = vmax.f32 %v605, %v606
    %v608 = vrot.slane %v607, 2
    %v609 = vmax.f32 %v607, %v608
    %v610 = vrot.slane %v609, 1
    %v611 = vmax.f32 %v609, %v610
    %v612 = vsel %vm478, %v457, -inf
    %v613 = vrot.slane %v612, 4
    %v614 = vmax.f32 %v612, %v613
    %v615 = vrot.slane %v614, 2
    %v616 = vmax.f32 %v614, %v615
    %v617 = vrot.slane %v616, 1
    %v618 = vmax.f32 %v616, %v617
    %v619 = vsel %vm478, %v458, -inf
    %v620 = vrot.slane %v619, 4
    %v621 = vmax.f32 %v619, %v620
    %v622 = vrot.slane %v621, 2
    %v623 = vmax.f32 %v621, %v622
    %v624 = vrot.slane %v623, 1
    %v625 = vmax.f32 %v623, %v624
    %v626 = vsel %vm478, %v459, -inf
    %v627 = vrot.slane %v626, 4
    %v628 = vmax.f32 %v626, %v627
    %v629 = vrot.slane %v628, 2
    %v630 = vmax.f32 %v628, %v629
    %v631 = vrot.slane %v630, 1
    %v632 = vmax.f32 %v630, %v631
    %v633 = vsel %vm478, %v460, -inf
    %v634 = vrot.slane %v633, 4
    %v635 = vmax.f32 %v633, %v634
    %v636 = vrot.slane %v635, 2
    %v637 = vmax.f32 %v635, %v636
    %v638 = vrot.slane %v637, 1
    %v639 = vmax.f32 %v637, %v638
    %v640 = vsel %vm478, %v461, -inf
    %v641 = vrot.slane %v640, 4
    %v642 = vmax.f32 %v640, %v641
    %v643 = vrot.slane %v642, 2
    %v644 = vmax.f32 %v642, %v643
    %v645 = vrot.slane %v644, 1
    %v646 = vmax.f32 %v644, %v645
    %v647 = vsel %vm478, %v462, -inf
    %v648 = vrot.slane %v647, 4
    %v649 = vmax.f32 %v647, %v648
    %v650 = vrot.slane %v649, 2
    %v651 = vmax.f32 %v649, %v650
    %v652 = vrot.slane %v651, 1
    %v653 = vmax.f32 %v651, %v652
    %v654 = vsel %vm478, %v463, -inf
    %v655 = vrot.slane %v654, 4
    %v656 = vmax.f32 %v654, %v655
    %v657 = vrot.slane %v656, 2
    %v658 = vmax.f32 %v656, %v657
    %v659 = vrot.slane %v658, 1
    %v660 = vmax.f32 %v658, %v659
    %v661 = vsel %vm478, %v464, -inf
    %v662 = vrot.slane %v661, 4
    %v663 = vmax.f32 %v661, %v662
    %v664 = vrot.slane %v663, 2
    %v665 = vmax.f32 %v663, %v664
    %v666 = vrot.slane %v665, 1
    %v667 = vmax.f32 %v665, %v666
    %v668 = vsel %vm478, %v465, -inf
    %v669 = vrot.slane %v668, 4
    %v670 = vmax.f32 %v668, %v669
    %v671 = vrot.slane %v670, 2
    %v672 = vmax.f32 %v670, %v671
    %v673 = vrot.slane %v672, 1
    %v674 = vmax.f32 %v672, %v673
    %v675 = vsel %vm478, %v466, -inf
    %v676 = vrot.slane %v675, 4
    %v677 = vmax.f32 %v675, %v676
    %v678 = vrot.slane %v677, 2
    %v679 = vmax.f32 %v677, %v678
    %v680 = vrot.slane %v679, 1
    %v681 = vmax.f32 %v679, %v680
    %v682 = vsel %vm478, %v467, -inf
    %v683 = vrot.slane %v682, 4
    %v684 = vmax.f32 %v682, %v683
    %v685 = vrot.slane %v684, 2
    %v686 = vmax.f32 %v684, %v685
    %v687 = vrot.slane %v686, 1
    %v688 = vmax.f32 %v686, %v687
    %v689 = vsel %vm478, %v468, -inf
    %v690 = vrot.slane %v689, 4
    %v691 = vmax.f32 %v689, %v690
    %v692 = vrot.slane %v691, 2
    %v693 = vmax.f32 %v691, %v692
    %v694 = vrot.slane %v693, 1
    %v695 = vmax.f32 %v693, %v694
    %v696 = vsel %vm478, %v469, -inf
    %v697 = vrot.slane %v696, 4
    %v698 = vmax.f32 %v696, %v697
    %v699 = vrot.slane %v698, 2
    %v700 = vmax.f32 %v698, %v699
    %v701 = vrot.slane %v700, 1
    %v702 = vmax.f32 %v700, %v701
    %v703 = vsel %vm478, %v470, -inf
    %v704 = vrot.slane %v703, 4
    %v705 = vmax.f32 %v703, %v704
    %v706 = vrot.slane %v705, 2
    %v707 = vmax.f32 %v705, %v706
    %v708 = vrot.slane %v707, 1
    %v709 = vmax.f32 %v707, %v708
    %v710 = vsel %vm478, %v471, -inf
    %v711 = vrot.slane %v710, 4
    %v712 = vmax.f32 %v710, %v711
    %v713 = vrot.slane %v712, 2
    %v714 = vmax.f32 %v712, %v713
    %v715 = vrot.slane %v714, 1
    %v716 = vmax.f32 %v714, %v715
    %v717 = vsel %vm478, %v472, -inf
    %v718 = vrot.slane %v717, 4
    %v719 = vmax.f32 %v717, %v718
    %v720 = vrot.slane %v719, 2
    %v721 = vmax.f32 %v719, %v720
    %v722 = vrot.slane %v721, 1
    %v723 = vmax.f32 %v721, %v722
    %v724 = vsel %vm478, %v473, -inf
    %v725 = vrot.slane %v724, 4
    %v726 = vmax.f32 %v724, %v725
    %v727 = vrot.slane %v726, 2
    %v728 = vmax.f32 %v726, %v727
    %v729 = vrot.slane %v728, 1
    %v730 = vmax.f32 %v728, %v729
    %v731 = vsel %vm478, %v474, -inf
    %v732 = vrot.slane %v731, 4
    %v733 = vmax.f32 %v731, %v732
    %v734 = vrot.slane %v733, 2
    %v735 = vmax.f32 %v733, %v734
    %v736 = vrot.slane %v735, 1
    %v737 = vmax.f32 %v735, %v736
    %v738 = vsel %vm478, %v475, -inf
    %v739 = vrot.slane %v738, 4
    %v740 = vmax.f32 %v738, %v739
    %v741 = vrot.slane %v740, 2
    %v742 = vmax.f32 %v740, %v741
    %v743 = vrot.slane %v742, 1
    %v744 = vmax.f32 %v742, %v743
    %v745 = vsel %vm478, %v476, -inf
    %v746 = vrot.slane %v745, 4
    %v747 = vmax.f32 %v745, %v746
    %v748 = vrot.slane %v747, 2
    %v749 = vmax.f32 %v747, %v748
    %v750 = vrot.slane %v749, 1
    %v751 = vmax.f32 %v749, %v750
    %v752 = vsel %vm478, %v477, -inf
    %v753 = vrot.slane %v752, 4
    %v754 = vmax.f32 %v752, %v753
    %v755 = vrot.slane %v754, 2
    %v756 = vmax.f32 %v754, %v755
    %v757 = vrot.slane %v756, 1
    %v758 = vmax.f32 %v756, %v757
    %v759 = vpack.c.bf16 %v485, %v485
    %v760 = vpack.c.bf16 %v492, %v492
    %v761 = vpack.c.bf16 %v499, %v499
    %v762 = vpack.c.bf16 %v506, %v506
    %v763 = vpack.c.bf16 %v513, %v513
    %v764 = vpack.c.bf16 %v520, %v520
    %v765 = vpack.c.bf16 %v527, %v527
    %v766 = vpack.c.bf16 %v534, %v534
    %v767 = vpack.c.bf16 %v541, %v541
    %v768 = vpack.c.bf16 %v548, %v548
    %v769 = vpack.c.bf16 %v555, %v555
    %v770 = vpack.c.bf16 %v562, %v562
    %v771 = vpack.c.bf16 %v569, %v569
    %v772 = vpack.c.bf16 %v576, %v576
    %v773 = vpack.c.bf16 %v583, %v583
    %v774 = vpack.c.bf16 %v590, %v590
    %v775 = vpack.c.bf16 %v597, %v597
    %v776 = vpack.c.bf16 %v604, %v604
    %v777 = vpack.c.bf16 %v611, %v611
    %v778 = vpack.c.bf16 %v618, %v618
    %v779 = vpack.c.bf16 %v625, %v625
    %v780 = vpack.c.bf16 %v632, %v632
    %v781 = vpack.c.bf16 %v639, %v639
    %v782 = vpack.c.bf16 %v646, %v646
    %v783 = vpack.c.bf16 %v653, %v653
    %v784 = vpack.c.bf16 %v660, %v660
    %v785 = vpack.c.bf16 %v667, %v667
    %v786 = vpack.c.bf16 %v674, %v674
    %v787 = vpack.c.bf16 %v681, %v681
    %v788 = vpack.c.bf16 %v688, %v688
    %v789 = vpack.c.bf16 %v695, %v695
    %v790 = vpack.c.bf16 %v702, %v702
    %v791 = vpack.c.bf16 %v709, %v709
    %v792 = vpack.c.bf16 %v716, %v716
    %v793 = vpack.c.bf16 %v723, %v723
    %v794 = vpack.c.bf16 %v730, %v730
    %v795 = vpack.c.bf16 %v737, %v737
    %v796 = vpack.c.bf16 %v744, %v744
    %v797 = vpack.c.bf16 %v751, %v751
    %v798 = vpack.c.bf16 %v758, %v758
    %v839 = vunpack.c.l.b16 %v759
    %v840 = vunpack.c.l.b16 %v760
    %v841 = vunpack.c.l.b16 %v761
    %v842 = vunpack.c.l.b16 %v762
    %v843 = vunpack.c.l.b16 %v763
    %v844 = vunpack.c.l.b16 %v764
    %v845 = vunpack.c.l.b16 %v765
    %v846 = vunpack.c.l.b16 %v766
    %v847 = vunpack.c.l.b16 %v767
    %v848 = vunpack.c.l.b16 %v768
    %v849 = vunpack.c.l.b16 %v769
    %v850 = vunpack.c.l.b16 %v770
    %v851 = vunpack.c.l.b16 %v771
    %v852 = vunpack.c.l.b16 %v772
    %v853 = vunpack.c.l.b16 %v773
    %v854 = vunpack.c.l.b16 %v774
    %v855 = vunpack.c.l.b16 %v775
    %v856 = vunpack.c.l.b16 %v776
    %v857 = vunpack.c.l.b16 %v777
    %v858 = vunpack.c.l.b16 %v778
    %v859 = vunpack.c.l.b16 %v779
    %v860 = vunpack.c.l.b16 %v780
    %v861 = vunpack.c.l.b16 %v781
    %v862 = vunpack.c.l.b16 %v782
    %v863 = vunpack.c.l.b16 %v783
    %v864 = vunpack.c.l.b16 %v784
    %v865 = vunpack.c.l.b16 %v785
    %v866 = vunpack.c.l.b16 %v786
    %v867 = vunpack.c.l.b16 %v787
    %v868 = vunpack.c.l.b16 %v788
    %v869 = vunpack.c.l.b16 %v789
    %v870 = vunpack.c.l.b16 %v790
    %v871 = vunpack.c.l.b16 %v791
    %v872 = vunpack.c.l.b16 %v792
    %v873 = vunpack.c.l.b16 %v793
    %v874 = vunpack.c.l.b16 %v794
    %v875 = vunpack.c.l.b16 %v795
    %v876 = vunpack.c.l.b16 %v796
    %v877 = vunpack.c.l.b16 %v797
    %v878 = vunpack.c.l.b16 %v798
    %v879 = vpack.c.b16 %v839, %v839
    %v880 = vpack.c.b16 %v840, %v840
    %v881 = vpack.c.b16 %v841, %v841
    %v882 = vpack.c.b16 %v842, %v842
    %v883 = vpack.c.b16 %v843, %v843
    %v884 = vpack.c.b16 %v844, %v844
    %v885 = vpack.c.b16 %v845, %v845
    %v886 = vpack.c.b16 %v846, %v846
    %v887 = vpack.c.b16 %v847, %v847
    %v888 = vpack.c.b16 %v848, %v848
    %v889 = vpack.c.b16 %v849, %v849
    %v890 = vpack.c.b16 %v850, %v850
    %v891 = vpack.c.b16 %v851, %v851
    %v892 = vpack.c.b16 %v852, %v852
    %v893 = vpack.c.b16 %v853, %v853
    %v894 = vpack.c.b16 %v854, %v854
    %v895 = vpack.c.b16 %v855, %v855
    %v896 = vpack.c.b16 %v856, %v856
    %v897 = vpack.c.b16 %v857, %v857
    %v898 = vpack.c.b16 %v858, %v858
    %v899 = vpack.c.b16 %v859, %v859
    %v900 = vpack.c.b16 %v860, %v860
    %v901 = vpack.c.b16 %v861, %v861
    %v902 = vpack.c.b16 %v862, %v862
    %v903 = vpack.c.b16 %v863, %v863
    %v904 = vpack.c.b16 %v864, %v864
    %v905 = vpack.c.b16 %v865, %v865
    %v906 = vpack.c.b16 %v866, %v866
    %v907 = vpack.c.b16 %v867, %v867
    %v908 = vpack.c.b16 %v868, %v868
    %v909 = vpack.c.b16 %v869, %v869
    %v910 = vpack.c.b16 %v870, %v870
    %v911 = vpack.c.b16 %v871, %v871
    %v912 = vpack.c.b16 %v872, %v872
    %v913 = vpack.c.b16 %v873, %v873
    %v914 = vpack.c.b16 %v874, %v874
    %v915 = vpack.c.b16 %v875, %v875
    %v916 = vpack.c.b16 %v876, %v876
    %v917 = vpack.c.b16 %v877, %v877
    %v918 = vpack.c.b16 %v878, %v878
    %v919 = vunpack.c.l.b16 %v879
    %v920 = vunpack.c.l.b16 %v880
    %v921 = vunpack.c.l.b16 %v881
    %v922 = vunpack.c.l.b16 %v882
    %v923 = vunpack.c.l.b16 %v883
    %v924 = vunpack.c.l.b16 %v884
    %v925 = vunpack.c.l.b16 %v885
    %v926 = vunpack.c.l.b16 %v886
    %v927 = vunpack.c.l.b16 %v887
    %v928 = vunpack.c.l.b16 %v888
    %v929 = vunpack.c.l.b16 %v889
    %v930 = vunpack.c.l.b16 %v890
    %v931 = vunpack.c.l.b16 %v891
    %v932 = vunpack.c.l.b16 %v892
    %v933 = vunpack.c.l.b16 %v893
    %v934 = vunpack.c.l.b16 %v894
    %v935 = vunpack.c.l.b16 %v895
    %v936 = vunpack.c.l.b16 %v896
    %v937 = vunpack.c.l.b16 %v897
    %v938 = vunpack.c.l.b16 %v898
    %v939 = vunpack.c.l.b16 %v899
    %v940 = vunpack.c.l.b16 %v900
    %v941 = vunpack.c.l.b16 %v901
    %v942 = vunpack.c.l.b16 %v902
    %v943 = vunpack.c.l.b16 %v903
    %v944 = vunpack.c.l.b16 %v904
    %v945 = vunpack.c.l.b16 %v905
    %v946 = vunpack.c.l.b16 %v906
    %v947 = vunpack.c.l.b16 %v907
    %v948 = vunpack.c.l.b16 %v908
    %v949 = vunpack.c.l.b16 %v909
    %v950 = vunpack.c.l.b16 %v910
    %v951 = vunpack.c.l.b16 %v911
    %v952 = vunpack.c.l.b16 %v912
    %v953 = vunpack.c.l.b16 %v913
    %v954 = vunpack.c.l.b16 %v914
    %v955 = vunpack.c.l.b16 %v915
    %v956 = vunpack.c.l.b16 %v916
    %v957 = vunpack.c.l.b16 %v917
    %v958 = vunpack.c.l.b16 %v918
    %vm959 = vcmask 1041409
    %v960 = vsel %vm959, %v920, %v919
    %vm961 = vcmask 1042434
    %v962 = vsel %vm961, %v921, %v960
    %vm963 = vcmask 1043459
    %v964 = vsel %vm963, %v922, %v962
    %vm965 = vcmask 1044484
    %v966 = vsel %vm965, %v923, %v964
    %vm967 = vcmask 1045509
    %v968 = vsel %vm967, %v924, %v966
    %vm969 = vcmask 1046534
    %v970 = vsel %vm969, %v925, %v968
    %vm971 = vcmask 1047559
    %v972 = vsel %vm971, %v926, %v970
    %v973 = vsel %vm959, %v928, %v927
    %v974 = vsel %vm961, %v929, %v973
    %v975 = vsel %vm963, %v930, %v974
    %v976 = vsel %vm965, %v931, %v975
    %v977 = vsel %vm967, %v932, %v976
    %v978 = vsel %vm969, %v933, %v977
    %v979 = vsel %vm971, %v934, %v978
    %v980 = vsel %vm959, %v936, %v935
    %v981 = vsel %vm961, %v937, %v980
    %v982 = vsel %vm963, %v938, %v981
    %v983 = vsel %vm965, %v939, %v982
    %v984 = vsel %vm967, %v940, %v983
    %v985 = vsel %vm969, %v941, %v984
    %v986 = vsel %vm971, %v942, %v985
    %v987 = vsel %vm959, %v944, %v943
    %v988 = vsel %vm961, %v945, %v987
    %v989 = vsel %vm963, %v946, %v988
    %v990 = vsel %vm965, %v947, %v989
    %v991 = vsel %vm967, %v948, %v990
    %v992 = vsel %vm969, %v949, %v991
    %v993 = vsel %vm971, %v950, %v992
    %v994 = vsel %vm959, %v952, %v951
    %v995 = vsel %vm961, %v953, %v994
    %v996 = vsel %vm963, %v954, %v995
    %v997 = vsel %vm965, %v955, %v996
    %v998 = vsel %vm967, %v956, %v997
    %v999 = vsel %vm969, %v957, %v998
    %v1000 = vsel %vm971, %v958, %v999
    %v1001 = vpack.c.b16 %v972, %v972
    %v1002 = vpack.c.b16 %v979, %v979
    %v1003 = vpack.c.b16 %v986, %v986
    %v1004 = vpack.c.b16 %v993, %v993
    %v1005 = vpack.c.b16 %v1000, %v1000
    %vm1011 = vcmask 519168
    %1012 = vst.msk [vmem:[#allocation2] sm:$0xf] %vm1011, %v1001
    %1013 = vst.msk [vmem:[#allocation2 + $0x4] sm:$0xf] %vm1011, %v1002
    %1014 = vst.msk [vmem:[#allocation2 + $0x8] sm:$0xf] %vm1011, %v1003
    %1015 = vst.msk [vmem:[#allocation2 + $0xc] sm:$0xf] %vm1011, %v1004
    %1016 = vst.msk [vmem:[#allocation2 + $0x10] sm:$0xf] %vm1011, %v1005
    // Predicated region
    $region18: #{tpu_custom_call.1} parent=1 // pred_check
      _
    $region19: #{tpu_custom_call.1} parent=1 // pred_check_branch
      %1018 = sbr.rel (0) target = $region21
    $region20: #{tpu_custom_call.1} parent=1 // pred_region
      %s1020 = ssub.s32 320, 320
      %1021 = vsyncadd [#allocation3], %s1020
      %s1022 = sshll.u32 [#allocation2], 4
      %s1023 = int_to_ptr.vmem [resolvable:$true] %s1022
      %1028 = dma.vmem_to_hbm [thread:$0]  %s1023, 320, %s4, [#allocation3], 64, 64, 4
    $region21: #{tpu_custom_call.1} parent=1 // pred_fallthru
      _
    // Predicated region
    $region22: #{tpu_custom_call.1} parent=1 // pred_check
      _
    $region23: #{tpu_custom_call.1} parent=1 // pred_check_branch
      %1030 = sbr.rel (0) target = $region25
    $region24: #{tpu_custom_call.1} parent=1 // pred_region
      %1031 = dma.done [#allocation3], 320
    $region25: #{tpu_custom_call.1} parent=1 // pred_fallthru
      _
    %1032 = vsyncpa [#allocation3], 1

</llo_original>
